<compile_context>
chip_gen: v7x
topology: tpu7x:2x2x1
jax: 0.10.0
libtpu: 0.0.40
codegen_flags: <defaults>
</compile_context>

<pallas_src>
import jax
import jax.numpy as jnp
import numpy as np
from jax import lax
from jax.experimental import pallas as pl
from jax.experimental.pallas import tpu as pltpu  # noqa: F401 (tiny kernel: defaults suffice)

# ---- problem sizes (small, consistent with the module) ---------------------
N      = 2          # batch
C_IN   = 4          # in_channels
C_OUT  = 8          # out_channels (!= C_IN -> downsample 1x1 conv exists)
L      = 16         # sequence length
K      = 3          # kernel_size
DIL    = 2          # dilation
PAD    = (K - 1) * DIL   # causal padding (chomped on the right)
STRIDE = 1
DROPOUT = 0.2            # identity at inference time

LANES = 128              # lane-dense output slab width (one native f32 tile)
SLAB  = PAD + N * L      # stage-1 slab width: PAD zero prefix + N*L real cols
XW    = 2 * PAD + N * L  # input slab width: extra PAD of zero left margin

# static sanity checks so the tap/slice construction cannot silently break if
# K / DIL / L change (reviewer's robustness concern)
assert PAD == (K - 1) * DIL                 # downsample rides on the unshifted tap
assert (K - 1) * DIL + SLAB <= XW           # every stage-1 tap slice is in-bounds
assert (K - 1) * DIL + N * L <= SLAB        # every stage-2 tap slice is in-bounds
assert N * L <= LANES                       # valid columns fit one 128-lane slab


def temporal_block_kernel(xw_ref, w1p_ref, w2p_ref, o_ref):
    """Whole TemporalBlock forward for the full batch in one invocation.

    xw_ref  : (C_IN, XW)            x in batch-major lane layout, left-padded
                                    with 2*PAD zero columns
    w1p_ref : (2*C_OUT, K*C_IN+1)   [conv1 taps ; downsample on last tap] with
                                    the bias column [b1 ; bd] appended
    w2p_ref : (C_OUT, K*C_OUT+1)    conv2 taps with bias column b2 appended
    o_ref   : (C_OUT, LANES)        lane-dense output slab; cols >= N*L are 0
    """
    xw  = xw_ref[...]
    w1p = w1p_ref[...]
    w2p = w2p_ref[...]
    f32 = jnp.float32

    # per-column "time within batch segment" index on the stage-1 slab
    q1 = lax.broadcasted_iota(jnp.int32, (C_IN, SLAB), 1)
    t1 = (q1 + (L - PAD)) % L            # == (q - PAD) mod L, non-negative operand

    # ---- stage 1: conv1 taps + fused 1x1 downsample, biases folded ---------
    # bias applies only to the N*L real columns so the PAD prefix stays exactly 0
    qb = lax.broadcasted_iota(jnp.int32, (2 * C_OUT, SLAB), 1)
    a1 = w1p[:, K * C_IN:] * (qb >= PAD).astype(f32)          # (2*C_OUT, SLAB)
    for j in range(K):
        s = PAD - j * DIL                                     # causal shift of tap j
        tap = xw[:, j * DIL: j * DIL + SLAB]                  # (C_IN, SLAB)
        if s > 0:                                             # zero cross-batch bleed
            tap = jnp.where(t1 >= s, tap, 0.0)
        a1 = a1 + jnp.dot(w1p[:, j * C_IN:(j + 1) * C_IN], tap,
                          preferred_element_type=f32)

    # first PAD columns of h1ext are exactly zero by construction
    h1ext = jnp.maximum(a1[:C_OUT, :], 0.0)                   # (C_OUT, SLAB)
    res   = a1[C_OUT:, PAD:]                                  # (C_OUT, N*L) = wd@x + bd
    # (dropout after the ReLUs is identity in eval mode)

    # ---- stage 2: conv2 built from in-register slices of h1ext -------------
    p2 = lax.broadcasted_iota(jnp.int32, (C_OUT, N * L), 1)
    t2 = p2 % L
    a2 = jnp.zeros((C_OUT, N * L), f32)
    for j in range(K):
        s = PAD - j * DIL
        tap = h1ext[:, j * DIL: j * DIL + N * L]              # (C_OUT, N*L)
        if s > 0:
            tap = jnp.where(t2 >= s, tap, 0.0)
        a2 = a2 + jnp.dot(w2p[:, j * C_OUT:(j + 1) * C_OUT], tap,
                          preferred_element_type=f32)
    a2 = a2 + w2p[:, K * C_OUT:]                              # + b2 (lane broadcast)

    out = jnp.maximum(jnp.maximum(a2, 0.0) + res, 0.0)        # (C_OUT, N*L)

    # ---- scatter into a lane-dense (C_OUT, 128) slab -> unmasked store -----
    rr = lax.broadcasted_iota(jnp.int32, (N * L, LANES), 0)
    cc = lax.broadcasted_iota(jnp.int32, (N * L, LANES), 1)
    scatter = (rr == cc).astype(f32)                          # [ I_{N*L} | 0 ]
    o_ref[...] = jnp.dot(out, scatter, preferred_element_type=f32)


def pack_temporal_block_params(w1, b1, w2, b2, wd, bd):
    """ONE-TIME (model-load) packing of all weights/biases into two operands.

    Not part of the per-inference-call path.
    """
    w1 = np.asarray(w1, np.float32); b1 = np.asarray(b1, np.float32)
    w2 = np.asarray(w2, np.float32); b2 = np.asarray(b2, np.float32)
    wd = np.asarray(wd, np.float32); bd = np.asarray(bd, np.float32)

    # stage 1: rows [0:C_OUT] = conv1 taps, rows [C_OUT:2*C_OUT] = downsample
    # riding on the unshifted last tap; last column is the bias [b1 ; bd].
    top = np.zeros((C_OUT, K * C_IN + 1), np.float32)
    bot = np.zeros((C_OUT, K * C_IN + 1), np.float32)
    for j in range(K):
        top[:, j * C_IN:(j + 1) * C_IN] = w1[:, :, j]
    top[:, K * C_IN] = b1
    bot[:, (K - 1) * C_IN:K * C_IN] = wd
    bot[:, K * C_IN] = bd
    w1p = np.concatenate([top, bot], axis=0)                  # (2*C_OUT, K*C_IN+1)

    # stage 2: conv2 taps with bias column b2 appended
    w2p = np.zeros((C_OUT, K * C_OUT + 1), np.float32)
    for j in range(K):
        w2p[:, j * C_OUT:(j + 1) * C_OUT] = w2[:, :, j]
    w2p[:, K * C_OUT] = b2                                    # (C_OUT, K*C_OUT+1)

    return jnp.asarray(w1p), jnp.asarray(w2p)


@jax.jit
def temporal_block(x, w1p, w2p):
    """x: (N, C_IN, L) f32, pre-packed weights -> (N, C_OUT, L) f32."""
    # minimal per-call layout plumbing: batch-major along lanes, plus a 2*PAD
    # zero left margin so every conv tap in the kernel is a static lane slice.
    xw = jnp.transpose(x, (1, 0, 2)).reshape(C_IN, N * L)
    xw_ext = jnp.pad(xw, ((0, 0), (2 * PAD, 0)))              # (C_IN, XW)

    out128 = pl.pallas_call(
        temporal_block_kernel,
        out_shape=jax.ShapeDtypeStruct((C_OUT, LANES), jnp.float32),
    )(xw_ext, w1p, w2p)                                       # no grid, whole-array VMEM refs

    # back to PyTorch NCL layout
    out = out128[:, :N * L].reshape(C_OUT, N, L)
    return jnp.transpose(out, (1, 0, 2))


def temporal_block_ref(x, w1, b1, w2, b2, wd, bd):
    """Pure-JAX reference mirroring the PyTorch module (eval mode)."""
    def conv1d(inp, w, b):
        y = lax.conv_general_dilated(
            inp, w, window_strides=(STRIDE,), padding=[(PAD, PAD)],
            rhs_dilation=(DIL,), dimension_numbers=('NCH', 'OIH', 'NCH'))
        return y[:, :, :L] + b[None, :, None]           # Chomp1d(PAD) + bias
    h1 = jax.nn.relu(conv1d(x, w1, b1))
    h2 = jax.nn.relu(conv1d(h1, w2, b2))
    res = jnp.einsum('oi,nil->nol', wd, x) + bd[None, :, None]
    return jax.nn.relu(h2 + res)


if __name__ == "__main__":
    key = jax.random.PRNGKey(0)
    kx, k1, kb1, k2, kb2, kd, kbd = jax.random.split(key, 7)

    x  = jax.random.normal(kx,  (N, C_IN, L),      dtype=jnp.float32)
    w1 = jax.random.normal(k1,  (C_OUT, C_IN, K),  dtype=jnp.float32) * 0.2
    b1 = jax.random.normal(kb1, (C_OUT,),          dtype=jnp.float32) * 0.1
    w2 = jax.random.normal(k2,  (C_OUT, C_OUT, K), dtype=jnp.float32) * 0.2
    b2 = jax.random.normal(kb2, (C_OUT,),          dtype=jnp.float32) * 0.1
    wd = jax.random.normal(kd,  (C_OUT, C_IN),     dtype=jnp.float32) * 0.2
    bd = jax.random.normal(kbd, (C_OUT,),          dtype=jnp.float32) * 0.1

    # one-time, load-time packing (NOT in the per-call path)
    w1p, w2p = pack_temporal_block_params(w1, b1, w2, b2, wd, bd)

    out = temporal_block(x, w1p, w2p)
    jax.block_until_ready(out)

    ref = temporal_block_ref(x, w1, b1, w2, b2, wd, bd)
    np.testing.assert_allclose(np.asarray(out), np.asarray(ref),
                               rtol=1e-5, atol=1e-5)
    print("KERNEL_OK")
</pallas_src>

<mosaic_0001>
module attributes {stable_mosaic.version = 11 : i64} {
  func.func @temporal_block_kernel(%arg0: memref<4x40xf32, #tpu.memory_space<vmem>>, %arg1: memref<16x13xf32, #tpu.memory_space<vmem>>, %arg2: memref<8x25xf32, #tpu.memory_space<vmem>>, %arg3: memref<8x128xf32, #tpu.memory_space<vmem>>) attributes {dimension_semantics = [], scalar_prefetch = 0 : i64, scratch_operands = 0 : i64, tpu.core_type = #tpu.core_type<tc>} {
    %c0 = arith.constant 0 : index
    %c0_0 = arith.constant 0 : index
    %0 = vector.load %arg0[%c0, %c0_0] : memref<4x40xf32, #tpu.memory_space<vmem>>, vector<4x40xf32>
    %c0_1 = arith.constant 0 : index
    %c0_2 = arith.constant 0 : index
    %1 = vector.load %arg1[%c0_1, %c0_2] : memref<16x13xf32, #tpu.memory_space<vmem>>, vector<16x13xf32>
    %c0_3 = arith.constant 0 : index
    %c0_4 = arith.constant 0 : index
    %2 = vector.load %arg2[%c0_3, %c0_4] : memref<8x25xf32, #tpu.memory_space<vmem>>, vector<8x25xf32>
    %3 = tpu.iota {dimensions = array<i32: 1>} : vector<4x36xi32>
    %c12_i32 = arith.constant 12 : i32
    %4 = vector.broadcast %c12_i32 : i32 to vector<4x36xi32>
    %5 = arith.addi %3, %4 : vector<4x36xi32>
    %c16_i32 = arith.constant 16 : i32
    %c0_i32 = arith.constant 0 : i32
    %6 = arith.cmpi eq, %c16_i32, %c0_i32 : i32
    %c1_i32 = arith.constant 1 : i32
    %7 = arith.select %6, %c1_i32, %c16_i32 : i32
    %8 = vector.broadcast %7 : i32 to vector<4x36xi32>
    %9 = arith.remsi %5, %8 : vector<4x36xi32>
    %c0_i32_5 = arith.constant 0 : i32
    %10 = vector.broadcast %c0_i32_5 : i32 to vector<4x36xi32>
    %11 = arith.cmpi ne, %9, %10 : vector<4x36xi32>
    %c0_i32_6 = arith.constant 0 : i32
    %12 = vector.broadcast %c0_i32_6 : i32 to vector<4x36xi32>
    %13 = arith.cmpi slt, %9, %12 : vector<4x36xi32>
    %c0_i32_7 = arith.constant 0 : i32
    %14 = arith.cmpi slt, %7, %c0_i32_7 : i32
    %15 = vector.broadcast %14 : i1 to vector<4x36xi1>
    %16 = vector.broadcast %15 : vector<4x36xi1> to vector<4x36xi1>
    %17 = arith.xori %13, %16 : vector<4x36xi1>
    %18 = arith.andi %17, %11 : vector<4x36xi1>
    %19 = vector.broadcast %7 : i32 to vector<4x36xi32>
    %20 = arith.addi %9, %19 : vector<4x36xi32>
    %21 = arith.select %18, %20, %9 : vector<4x36xi1>, vector<4x36xi32>
    %22 = tpu.iota {dimensions = array<i32: 1>} : vector<16x36xi32>
    %23 = vector.extract_strided_slice %1 {offsets = [0, 12], sizes = [16, 1], strides = [1, 1]} : vector<16x13xf32> to vector<16x1xf32>
    %c4_i32 = arith.constant 4 : i32
    %24 = vector.broadcast %c4_i32 : i32 to vector<16x36xi32>
    %25 = arith.cmpi sge, %22, %24 : vector<16x36xi32>
    %26 = arith.extui %25 : vector<16x36xi1> to vector<16x36xi32>
    %27 = arith.sitofp %26 : vector<16x36xi32> to vector<16x36xf32>
    %28 = vector.broadcast %23 : vector<16x1xf32> to vector<16x36xf32>
    %29 = arith.mulf %28, %27 : vector<16x36xf32>
    %30 = vector.extract_strided_slice %0 {offsets = [0, 0], sizes = [4, 36], strides = [1, 1]} : vector<4x40xf32> to vector<4x36xf32>
    %c4_i32_8 = arith.constant 4 : i32
    %31 = vector.broadcast %c4_i32_8 : i32 to vector<4x36xi32>
    %32 = arith.cmpi sge, %21, %31 : vector<4x36xi32>
    %cst = arith.constant 0.000000e+00 : f32
    %33 = vector.broadcast %cst : f32 to vector<4x36xf32>
    %34 = arith.select %32, %30, %33 : vector<4x36xi1>, vector<4x36xf32>
    %35 = vector.extract_strided_slice %1 {offsets = [0, 0], sizes = [16, 4], strides = [1, 1]} : vector<16x13xf32> to vector<16x4xf32>
    %cst_9 = arith.constant dense<0.000000e+00> : vector<16x36xf32>
    %36 = tpu.matmul %35, %34, %cst_9 {dimension_numbers = #tpu.dot_dimension_numbers<[1], [0], [0], [1], [0, 0, 1, 1], [], []>} : vector<16x4xf32>, vector<4x36xf32>, vector<16x36xf32> -> vector<16x36xf32>
    %37 = arith.addf %29, %36 : vector<16x36xf32>
    %38 = vector.extract_strided_slice %0 {offsets = [0, 2], sizes = [4, 36], strides = [1, 1]} : vector<4x40xf32> to vector<4x36xf32>
    %c2_i32 = arith.constant 2 : i32
    %39 = vector.broadcast %c2_i32 : i32 to vector<4x36xi32>
    %40 = arith.cmpi sge, %21, %39 : vector<4x36xi32>
    %cst_10 = arith.constant 0.000000e+00 : f32
    %41 = vector.broadcast %cst_10 : f32 to vector<4x36xf32>
    %42 = arith.select %40, %38, %41 : vector<4x36xi1>, vector<4x36xf32>
    %43 = vector.extract_strided_slice %1 {offsets = [0, 4], sizes = [16, 4], strides = [1, 1]} : vector<16x13xf32> to vector<16x4xf32>
    %cst_11 = arith.constant dense<0.000000e+00> : vector<16x36xf32>
    %44 = tpu.matmul %43, %42, %cst_11 {dimension_numbers = #tpu.dot_dimension_numbers<[1], [0], [0], [1], [0, 0, 1, 1], [], []>} : vector<16x4xf32>, vector<4x36xf32>, vector<16x36xf32> -> vector<16x36xf32>
    %45 = arith.addf %37, %44 : vector<16x36xf32>
    %46 = vector.extract_strided_slice %0 {offsets = [0, 4], sizes = [4, 36], strides = [1, 1]} : vector<4x40xf32> to vector<4x36xf32>
    %47 = vector.extract_strided_slice %1 {offsets = [0, 8], sizes = [16, 4], strides = [1, 1]} : vector<16x13xf32> to vector<16x4xf32>
    %cst_12 = arith.constant dense<0.000000e+00> : vector<16x36xf32>
    %48 = tpu.matmul %47, %46, %cst_12 {dimension_numbers = #tpu.dot_dimension_numbers<[1], [0], [0], [1], [0, 0, 1, 1], [], []>} : vector<16x4xf32>, vector<4x36xf32>, vector<16x36xf32> -> vector<16x36xf32>
    %49 = arith.addf %45, %48 : vector<16x36xf32>
    %50 = vector.extract_strided_slice %49 {offsets = [0, 0], sizes = [8, 36], strides = [1, 1]} : vector<16x36xf32> to vector<8x36xf32>
    %cst_13 = arith.constant 0.000000e+00 : f32
    %51 = vector.broadcast %cst_13 : f32 to vector<8x36xf32>
    %52 = arith.maximumf %50, %51 : vector<8x36xf32>
    %53 = vector.extract_strided_slice %49 {offsets = [8, 4], sizes = [8, 32], strides = [1, 1]} : vector<16x36xf32> to vector<8x32xf32>
    %54 = tpu.iota {dimensions = array<i32: 1>} : vector<8x32xi32>
    %c16_i32_14 = arith.constant 16 : i32
    %c0_i32_15 = arith.constant 0 : i32
    %55 = arith.cmpi eq, %c16_i32_14, %c0_i32_15 : i32
    %c1_i32_16 = arith.constant 1 : i32
    %56 = arith.select %55, %c1_i32_16, %c16_i32_14 : i32
    %57 = vector.broadcast %56 : i32 to vector<8x32xi32>
    %58 = arith.remsi %54, %57 : vector<8x32xi32>
    %c0_i32_17 = arith.constant 0 : i32
    %59 = vector.broadcast %c0_i32_17 : i32 to vector<8x32xi32>
    %60 = arith.cmpi ne, %58, %59 : vector<8x32xi32>
    %c0_i32_18 = arith.constant 0 : i32
    %61 = vector.broadcast %c0_i32_18 : i32 to vector<8x32xi32>
    %62 = arith.cmpi slt, %58, %61 : vector<8x32xi32>
    %c0_i32_19 = arith.constant 0 : i32
    %63 = arith.cmpi slt, %56, %c0_i32_19 : i32
    %64 = vector.broadcast %63 : i1 to vector<8x32xi1>
    %65 = vector.broadcast %64 : vector<8x32xi1> to vector<8x32xi1>
    %66 = arith.xori %62, %65 : vector<8x32xi1>
    %67 = arith.andi %66, %60 : vector<8x32xi1>
    %68 = vector.broadcast %56 : i32 to vector<8x32xi32>
    %69 = arith.addi %58, %68 : vector<8x32xi32>
    %70 = arith.select %67, %69, %58 : vector<8x32xi1>, vector<8x32xi32>
    %cst_20 = arith.constant 0.000000e+00 : f32
    %71 = vector.broadcast %cst_20 : f32 to vector<8x32xf32>
    %72 = vector.extract_strided_slice %52 {offsets = [0, 0], sizes = [8, 32], strides = [1, 1]} : vector<8x36xf32> to vector<8x32xf32>
    %c4_i32_21 = arith.constant 4 : i32
    %73 = vector.broadcast %c4_i32_21 : i32 to vector<8x32xi32>
    %74 = arith.cmpi sge, %70, %73 : vector<8x32xi32>
    %cst_22 = arith.constant 0.000000e+00 : f32
    %75 = vector.broadcast %cst_22 : f32 to vector<8x32xf32>
    %76 = arith.select %74, %72, %75 : vector<8x32xi1>, vector<8x32xf32>
    %77 = vector.extract_strided_slice %2 {offsets = [0, 0], sizes = [8, 8], strides = [1, 1]} : vector<8x25xf32> to vector<8x8xf32>
    %cst_23 = arith.constant dense<0.000000e+00> : vector<8x32xf32>
    %78 = tpu.matmul %77, %76, %cst_23 {dimension_numbers = #tpu.dot_dimension_numbers<[1], [0], [0], [1], [0, 0, 1, 1], [], []>} : vector<8x8xf32>, vector<8x32xf32>, vector<8x32xf32> -> vector<8x32xf32>
    %79 = arith.addf %71, %78 : vector<8x32xf32>
    %80 = vector.extract_strided_slice %52 {offsets = [0, 2], sizes = [8, 32], strides = [1, 1]} : vector<8x36xf32> to vector<8x32xf32>
    %c2_i32_24 = arith.constant 2 : i32
    %81 = vector.broadcast %c2_i32_24 : i32 to vector<8x32xi32>
    %82 = arith.cmpi sge, %70, %81 : vector<8x32xi32>
    %cst_25 = arith.constant 0.000000e+00 : f32
    %83 = vector.broadcast %cst_25 : f32 to vector<8x32xf32>
    %84 = arith.select %82, %80, %83 : vector<8x32xi1>, vector<8x32xf32>
    %85 = vector.extract_strided_slice %2 {offsets = [0, 8], sizes = [8, 8], strides = [1, 1]} : vector<8x25xf32> to vector<8x8xf32>
    %cst_26 = arith.constant dense<0.000000e+00> : vector<8x32xf32>
    %86 = tpu.matmul %85, %84, %cst_26 {dimension_numbers = #tpu.dot_dimension_numbers<[1], [0], [0], [1], [0, 0, 1, 1], [], []>} : vector<8x8xf32>, vector<8x32xf32>, vector<8x32xf32> -> vector<8x32xf32>
    %87 = arith.addf %79, %86 : vector<8x32xf32>
    %88 = vector.extract_strided_slice %52 {offsets = [0, 4], sizes = [8, 32], strides = [1, 1]} : vector<8x36xf32> to vector<8x32xf32>
    %89 = vector.extract_strided_slice %2 {offsets = [0, 16], sizes = [8, 8], strides = [1, 1]} : vector<8x25xf32> to vector<8x8xf32>
    %cst_27 = arith.constant dense<0.000000e+00> : vector<8x32xf32>
    %90 = tpu.matmul %89, %88, %cst_27 {dimension_numbers = #tpu.dot_dimension_numbers<[1], [0], [0], [1], [0, 0, 1, 1], [], []>} : vector<8x8xf32>, vector<8x32xf32>, vector<8x32xf32> -> vector<8x32xf32>
    %91 = arith.addf %87, %90 : vector<8x32xf32>
    %92 = vector.extract_strided_slice %2 {offsets = [0, 24], sizes = [8, 1], strides = [1, 1]} : vector<8x25xf32> to vector<8x1xf32>
    %93 = vector.broadcast %92 : vector<8x1xf32> to vector<8x32xf32>
    %94 = arith.addf %91, %93 : vector<8x32xf32>
    %cst_28 = arith.constant 0.000000e+00 : f32
    %95 = vector.broadcast %cst_28 : f32 to vector<8x32xf32>
    %96 = arith.maximumf %94, %95 : vector<8x32xf32>
    %97 = arith.addf %96, %53 : vector<8x32xf32>
    %cst_29 = arith.constant 0.000000e+00 : f32
    %98 = vector.broadcast %cst_29 : f32 to vector<8x32xf32>
    %99 = arith.maximumf %97, %98 : vector<8x32xf32>
    %100 = tpu.iota {dimensions = array<i32: 0>} : vector<32x128xi32>
    %101 = tpu.iota {dimensions = array<i32: 1>} : vector<32x128xi32>
    %102 = arith.cmpi eq, %100, %101 : vector<32x128xi32>
    %103 = arith.extui %102 : vector<32x128xi1> to vector<32x128xi32>
    %104 = arith.sitofp %103 : vector<32x128xi32> to vector<32x128xf32>
    %cst_30 = arith.constant dense<0.000000e+00> : vector<8x128xf32>
    %105 = tpu.matmul %99, %104, %cst_30 {dimension_numbers = #tpu.dot_dimension_numbers<[1], [0], [0], [1], [0, 0, 1, 1], [], []>} : vector<8x32xf32>, vector<32x128xf32>, vector<8x128xf32> -> vector<8x128xf32>
    %c0_31 = arith.constant 0 : index
    %c0_32 = arith.constant 0 : index
    %106 = vector.load %arg3[%c0_31, %c0_32] : memref<8x128xf32, #tpu.memory_space<vmem>>, vector<8x128xf32>
    tpu.vector_store %arg3[%c0_31, %c0_32], %105 {strides = array<i32>} : memref<8x128xf32, #tpu.memory_space<vmem>>, vector<8x128xf32>,
    return
  }
}

</mosaic_0001>

<llo_original>
// kernel: temporal_block.1
$region0: #{temporal_block.1}
  #allocation0 [shape = 'u32[]', space=smem, size = 0x4, offset = 0x4, fixed_abs, tag = 'smem constant byte address 0x4 - core index']
  #allocation1 [shape = 'u32[144,128]{1,0:T(1,128)}', space=vmem, size = 0x12000, scoped, tag = 'internal scratch']
  %s0 = inlined_call_operand.vmem [shape: f32[4,40], index: 0, kind: input, shape index: {}]
  %s1 = inlined_call_operand.vmem [shape: f32[16,13], index: 1, kind: input, shape index: {}]
  %s2 = inlined_call_operand.vmem [shape: f32[8,25], index: 2, kind: input, shape index: {}]
  %s3 = inlined_call_operand.vmem [shape: f32[8,128], index: 3, kind: output, shape index: {}]
  %s4 = sld [smem:[#allocation0]]
  $region22: #{temporal_block.1} parent=0
    _
  %s6 = ssub.s32 1, %s4
  %s7 = scalar_select 0, %s6, %s4
  // Predicated region
  $region2: #{temporal_block.1} parent=0 // pred_check
    _
  $region3: #{temporal_block.1} parent=0 // pred_check_branch
    %9 = sbr.rel (0) target = $region5
  $region4: #{temporal_block.1} parent=0 // pred_region
    _
  $region5: #{temporal_block.1} parent=0 // pred_fallthru
    _
  // Predicated region
  $region6: #{temporal_block.1} parent=0 // pred_check
    _
  $region7: #{temporal_block.1} parent=0 // pred_check_branch
    %11 = sbr.rel (0) target = $region9
  $region8: #{temporal_block.1} parent=0 // pred_region
    _
  $region9: #{temporal_block.1} parent=0 // pred_fallthru
    _
  // Predicated region
  $region10: #{temporal_block.1} parent=0 // pred_check
    _
  $region11: #{temporal_block.1} parent=0 // pred_check_branch
    %13 = sbr.rel (0) target = $region13
  $region12: #{temporal_block.1} parent=0 // pred_region
    _
  $region13: #{temporal_block.1} parent=0 // pred_fallthru
    _
  %v14 = vld [vmem:[%s0] sm:$0xf]
  %v15 = vld [vmem:[%s1] sm:$0xff]
  %v16 = vld [vmem:[%s1 + $0x8] sm:$0xff]
  %v17 = vld [vmem:[%s2] sm:$0xff]
  %v18 = vlaneseq
  %v19 = vand.u32 %v18, 127
  %v20 = vadd.s32 %v19, 12
  %vm21 = vcmp.lt.s32.totalorder %v20, 0
  %v22 = vsub.s32 0, %v20
  %v23 = vsel %vm21, %v22, %v20
  %v24 = vshrl.u32 %v23, 4
  %v25 = vand.u32 %v23, 15
  %v26 = vsub.s32 0, %v25
  %v27 = vsel %vm21, %v26, %v25
  %vm28 = vcmp.ne.s32.totalorder %v27, 0
  %vm29 = vcmp.lt.s32.totalorder %v27, 0
  %vm30 = vmand %vm29, %vm28
  %v31 = vadd.s32 %v27, 16
  %v32 = vsel %vm30, %v31, %v27
  %vm33 = vcmp.ge.s32.totalorder %v19, 4
  %v34 = vsel %vm33, 1, 0
  %v35 = vcvt.s32.f32 %v34
  %37 = vset.pattern.permute.xlu0 12
  %38 = vperm.xlu0 %37, %v15
  %v39 = vpop.permute.xlu0 %38
  %42 = vset.pattern.permute.xlu0 12
  %43 = vperm.xlu0 %42, %v16
  %v44 = vpop.permute.xlu0 %43
  %v46 = vmul.f32 %v39, %v35
  %v47 = vmul.f32 %v44, %v35
  %vm48 = vcmp.ge.s32.totalorder %v32, 4
  %v49 = vsel %vm48, %v14, 0.0
  %vm50 = vcmask 31744
  %v51 = vsel %vm50, %v15, 0
  %v53 = vsel %vm50, %v16, 0
  %vm55 = vcmask 1043456
  %v57 = vsel %vm55, %v49, 0
  %59 = vmatprep.subr.mxu0 0.0
  %60 = vmatpush1.msra.mxu0 %v57
  %61 = vmatprep.subr.mxu0 0.0
  %62 = vmatpush1.msra.mxu0 0.0
  %63 = vmatprep.subr.mxu0 0.0
  %64 = vmatpush1.msra.mxu0 0.0
  %65 = vmatprep.subr.mxu0 0.0
  %66 = vmatpush1.msra.mxu0 0.0
  %67 = vmatprep.subr.mxu0 0.0
  %68 = vmatpush1.msra.mxu0 0.0
  %69 = vmatprep.subr.mxu0 0.0
  %70 = vmatpush1.msra.mxu0 0.0
  %71 = vmatprep.subr.mxu0 0.0
  %72 = vmatpush1.msra.mxu0 0.0
  %73 = vmatprep.subr.mxu0 0.0
  %74 = vmatpush1.msra.mxu0 0.0
  %75 = vmatprep.subr.mxu0 0.0
  %76 = vmatpush1.msra.mxu0 0.0
  %77 = vmatprep.subr.mxu0 0.0
  %78 = vmatpush1.msra.mxu0 0.0
  %79 = vmatprep.subr.mxu0 0.0
  %80 = vmatpush1.msra.mxu0 0.0
  %81 = vmatprep.subr.mxu0 0.0
  %82 = vmatpush1.msra.mxu0 0.0
  %83 = vmatprep.subr.mxu0 0.0
  %84 = vmatpush1.msra.mxu0 0.0
  %85 = vmatprep.subr.mxu0 0.0
  %86 = vmatpush1.msra.mxu0 0.0
  %87 = vmatprep.subr.mxu0 0.0
  %88 = vmatpush1.msra.mxu0 0.0
  %89 = vmatprep.subr.mxu0 0.0
  %90 = vmatpush1.msra.mxu0 0.0
  %91 = vmatprep.subr.mxu0 0.0
  %92 = vmatpush1.msra.mxu0 0.0
  %93 = vmatprep.subr.mxu0 0.0
  %94 = vmatpush1.msra.mxu0 0.0
  %95 = vmatprep.subr.mxu0 0.0
  %96 = vmatpush1.msra.mxu0 0.0
  %97 = vmatprep.subr.mxu0 0.0
  %98 = vmatpush1.msra.mxu0 0.0
  %99 = vmatprep.subr.mxu0 0.0
  %100 = vmatpush1.msra.mxu0 0.0
  %101 = vmatprep.subr.mxu0 0.0
  %102 = vmatpush1.msra.mxu0 0.0
  %103 = vmatprep.subr.mxu0 0.0
  %104 = vmatpush1.msra.mxu0 0.0
  %105 = vmatprep.subr.mxu0 0.0
  %106 = vmatpush1.msra.mxu0 0.0
  %107 = vmatprep.subr.mxu0 0.0
  %108 = vmatpush1.msra.mxu0 0.0
  %109 = vmatprep.subr.mxu0 0.0
  %110 = vmatpush1.msra.mxu0 0.0
  %111 = vmatprep.subr.mxu0 0.0
  %112 = vmatpush1.msra.mxu0 0.0
  %113 = vmatprep.subr.mxu0 0.0
  %114 = vmatpush1.msra.mxu0 0.0
  %115 = vmatprep.subr.mxu0 0.0
  %116 = vmatpush1.msra.mxu0 0.0
  %117 = vmatprep.subr.mxu0 0.0
  %118 = vmatpush1.msra.mxu0 0.0
  %119 = vmatprep.subr.mxu0 0.0
  %120 = vmatpush1.msra.mxu0 0.0
  %121 = vmatprep.subr.mxu0 0.0
  %122 = vmatpush1.msra.mxu0 0.0
  %123 = vmatprep.mubr.f32.mxu0 0.0
  %124 = vmatmul.mubr.f32.gmra.mrb[0].mxu0 %v51
  %v125 = vpop.f32.mrb[0].mxu0
  %v126 = vadd.f32 0.0, %v125
  %v127 = vpop.f32.mrb[0].mxu0
  %128 = vmatprep.mubr.f32.mxu0 0.0
  %129 = vmatmul.mubr.f32.gmra.mrb[0].mxu0 %v53
  %v130 = vpop.f32.mrb[0].mxu0
  %v131 = vadd.f32 0.0, %v130
  %v132 = vpop.f32.mrb[0].mxu0
  %133 = vdwg.mxu0
  %v134 = vadd.f32 %v46, %v126
  %v135 = vadd.f32 %v47, %v131
  %vm136 = vcmp.ge.s32.totalorder %v32, 2
  %138 = vrot.lane.b32.xlu0 %v14, 126
  %v139 = vpop.permute.xlu0 %138
  %v141 = vsel %vm136, %v139, 0.0
  %142 = vrot.lane.b32.xlu0 %v15, 124
  %v143 = vpop.permute.xlu0 %142
  %144 = vrot.lane.b32.xlu0 %v16, 124
  %v145 = vpop.permute.xlu0 %144
  %v146 = vsel %vm50, %v143, 0
  %v148 = vsel %vm50, %v145, 0
  %v151 = vsel %vm55, %v141, 0
  %153 = vmatprep.subr.mxu0 0.0
  %154 = vmatpush1.msra.mxu0 %v151
  %155 = vmatprep.subr.mxu0 0.0
  %156 = vmatpush1.msra.mxu0 0.0
  %157 = vmatprep.subr.mxu0 0.0
  %158 = vmatpush1.msra.mxu0 0.0
  %159 = vmatprep.subr.mxu0 0.0
  %160 = vmatpush1.msra.mxu0 0.0
  %161 = vmatprep.subr.mxu0 0.0
  %162 = vmatpush1.msra.mxu0 0.0
  %163 = vmatprep.subr.mxu0 0.0
  %164 = vmatpush1.msra.mxu0 0.0
  %165 = vmatprep.subr.mxu0 0.0
  %166 = vmatpush1.msra.mxu0 0.0
  %167 = vmatprep.subr.mxu0 0.0
  %168 = vmatpush1.msra.mxu0 0.0
  %169 = vmatprep.subr.mxu0 0.0
  %170 = vmatpush1.msra.mxu0 0.0
  %171 = vmatprep.subr.mxu0 0.0
  %172 = vmatpush1.msra.mxu0 0.0
  %173 = vmatprep.subr.mxu0 0.0
  %174 = vmatpush1.msra.mxu0 0.0
  %175 = vmatprep.subr.mxu0 0.0
  %176 = vmatpush1.msra.mxu0 0.0
  %177 = vmatprep.subr.mxu0 0.0
  %178 = vmatpush1.msra.mxu0 0.0
  %179 = vmatprep.subr.mxu0 0.0
  %180 = vmatpush1.msra.mxu0 0.0
  %181 = vmatprep.subr.mxu0 0.0
  %182 = vmatpush1.msra.mxu0 0.0
  %183 = vmatprep.subr.mxu0 0.0
  %184 = vmatpush1.msra.mxu0 0.0
  %185 = vmatprep.subr.mxu0 0.0
  %186 = vmatpush1.msra.mxu0 0.0
  %187 = vmatprep.subr.mxu0 0.0
  %188 = vmatpush1.msra.mxu0 0.0
  %189 = vmatprep.subr.mxu0 0.0
  %190 = vmatpush1.msra.mxu0 0.0
  %191 = vmatprep.subr.mxu0 0.0
  %192 = vmatpush1.msra.mxu0 0.0
  %193 = vmatprep.subr.mxu0 0.0
  %194 = vmatpush1.msra.mxu0 0.0
  %195 = vmatprep.subr.mxu0 0.0
  %196 = vmatpush1.msra.mxu0 0.0
  %197 = vmatprep.subr.mxu0 0.0
  %198 = vmatpush1.msra.mxu0 0.0
  %199 = vmatprep.subr.mxu0 0.0
  %200 = vmatpush1.msra.mxu0 0.0
  %201 = vmatprep.subr.mxu0 0.0
  %202 = vmatpush1.msra.mxu0 0.0
  %203 = vmatprep.subr.mxu0 0.0
  %204 = vmatpush1.msra.mxu0 0.0
  %205 = vmatprep.subr.mxu0 0.0
  %206 = vmatpush1.msra.mxu0 0.0
  %207 = vmatprep.subr.mxu0 0.0
  %208 = vmatpush1.msra.mxu0 0.0
  %209 = vmatprep.subr.mxu0 0.0
  %210 = vmatpush1.msra.mxu0 0.0
  %211 = vmatprep.subr.mxu0 0.0
  %212 = vmatpush1.msra.mxu0 0.0
  %213 = vmatprep.subr.mxu0 0.0
  %214 = vmatpush1.msra.mxu0 0.0
  %215 = vmatprep.subr.mxu0 0.0
  %216 = vmatpush1.msra.mxu0 0.0
  %217 = vmatprep.mubr.f32.mxu0 0.0
  %218 = vmatmul.mubr.f32.gmra.mrb[0].mxu0 %v146
  %v219 = vpop.f32.mrb[0].mxu0
  %v220 = vadd.f32 0.0, %v219
  %v221 = vpop.f32.mrb[0].mxu0
  %222 = vmatprep.mubr.f32.mxu0 0.0
  %223 = vmatmul.mubr.f32.gmra.mrb[0].mxu0 %v148
  %v224 = vpop.f32.mrb[0].mxu0
  %v225 = vadd.f32 0.0, %v224
  %v226 = vpop.f32.mrb[0].mxu0
  %227 = vdwg.mxu0
  %v228 = vadd.f32 %v134, %v220
  %v229 = vadd.f32 %v135, %v225
  %230 = vrot.lane.b32.xlu0 %v15, 120
  %v231 = vpop.permute.xlu0 %230
  %232 = vrot.lane.b32.xlu0 %v16, 120
  %v233 = vpop.permute.xlu0 %232
  %234 = vrot.lane.b32.xlu0 %v14, 124
  %v235 = vpop.permute.xlu0 %234
  %v236 = vsel %vm50, %v231, 0
  %v238 = vsel %vm50, %v233, 0
  %v240 = vsel %vm55, %v235, 0
  %242 = vmatprep.subr.mxu0 0.0
  %243 = vmatpush1.msra.mxu0 %v240
  %244 = vmatprep.subr.mxu0 0.0
  %245 = vmatpush1.msra.mxu0 0.0
  %246 = vmatprep.subr.mxu0 0.0
  %247 = vmatpush1.msra.mxu0 0.0
  %248 = vmatprep.subr.mxu0 0.0
  %249 = vmatpush1.msra.mxu0 0.0
  %250 = vmatprep.subr.mxu0 0.0
  %251 = vmatpush1.msra.mxu0 0.0
  %252 = vmatprep.subr.mxu0 0.0
  %253 = vmatpush1.msra.mxu0 0.0
  %254 = vmatprep.subr.mxu0 0.0
  %255 = vmatpush1.msra.mxu0 0.0
  %256 = vmatprep.subr.mxu0 0.0
  %257 = vmatpush1.msra.mxu0 0.0
  %258 = vmatprep.subr.mxu0 0.0
  %259 = vmatpush1.msra.mxu0 0.0
  %260 = vmatprep.subr.mxu0 0.0
  %261 = vmatpush1.msra.mxu0 0.0
  %262 = vmatprep.subr.mxu0 0.0
  %263 = vmatpush1.msra.mxu0 0.0
  %264 = vmatprep.subr.mxu0 0.0
  %265 = vmatpush1.msra.mxu0 0.0
  %266 = vmatprep.subr.mxu0 0.0
  %267 = vmatpush1.msra.mxu0 0.0
  %268 = vmatprep.subr.mxu0 0.0
  %269 = vmatpush1.msra.mxu0 0.0
  %270 = vmatprep.subr.mxu0 0.0
  %271 = vmatpush1.msra.mxu0 0.0
  %272 = vmatprep.subr.mxu0 0.0
  %273 = vmatpush1.msra.mxu0 0.0
  %274 = vmatprep.subr.mxu0 0.0
  %275 = vmatpush1.msra.mxu0 0.0
  %276 = vmatprep.subr.mxu0 0.0
  %277 = vmatpush1.msra.mxu0 0.0
  %278 = vmatprep.subr.mxu0 0.0
  %279 = vmatpush1.msra.mxu0 0.0
  %280 = vmatprep.subr.mxu0 0.0
  %281 = vmatpush1.msra.mxu0 0.0
  %282 = vmatprep.subr.mxu0 0.0
  %283 = vmatpush1.msra.mxu0 0.0
  %284 = vmatprep.subr.mxu0 0.0
  %285 = vmatpush1.msra.mxu0 0.0
  %286 = vmatprep.subr.mxu0 0.0
  %287 = vmatpush1.msra.mxu0 0.0
  %288 = vmatprep.subr.mxu0 0.0
  %289 = vmatpush1.msra.mxu0 0.0
  %290 = vmatprep.subr.mxu0 0.0
  %291 = vmatpush1.msra.mxu0 0.0
  %292 = vmatprep.subr.mxu0 0.0
  %293 = vmatpush1.msra.mxu0 0.0
  %294 = vmatprep.subr.mxu0 0.0
  %295 = vmatpush1.msra.mxu0 0.0
  %296 = vmatprep.subr.mxu0 0.0
  %297 = vmatpush1.msra.mxu0 0.0
  %298 = vmatprep.subr.mxu0 0.0
  %299 = vmatpush1.msra.mxu0 0.0
  %300 = vmatprep.subr.mxu0 0.0
  %301 = vmatpush1.msra.mxu0 0.0
  %302 = vmatprep.subr.mxu0 0.0
  %303 = vmatpush1.msra.mxu0 0.0
  %304 = vmatprep.subr.mxu0 0.0
  %305 = vmatpush1.msra.mxu0 0.0
  %306 = vmatprep.mubr.f32.mxu0 0.0
  %307 = vmatmul.mubr.f32.gmra.mrb[0].mxu0 %v236
  %v308 = vpop.f32.mrb[0].mxu0
  %v309 = vadd.f32 0.0, %v308
  %v310 = vpop.f32.mrb[0].mxu0
  %311 = vmatprep.mubr.f32.mxu0 0.0
  %312 = vmatmul.mubr.f32.gmra.mrb[0].mxu0 %v238
  %v313 = vpop.f32.mrb[0].mxu0
  %v314 = vadd.f32 0.0, %v313
  %v315 = vpop.f32.mrb[0].mxu0
  %316 = vdwg.mxu0
  %v317 = vadd.f32 %v228, %v309
  %v318 = vadd.f32 %v229, %v314
  %v319 = vmax.f32 %v317, 0.0
  %vm320 = vcmp.lt.s32.totalorder %v19, 0
  %v321 = vsub.s32 0, %v19
  %v322 = vsel %vm320, %v321, %v19
  %v323 = vshrl.u32 %v322, 4
  %v324 = vand.u32 %v322, 15
  %v325 = vsub.s32 0, %v324
  %v326 = vsel %vm320, %v325, %v324
  %vm327 = vcmp.ne.s32.totalorder %v326, 0
  %vm328 = vcmp.lt.s32.totalorder %v326, 0
  %vm329 = vmand %vm328, %vm327
  %v330 = vadd.s32 %v326, 16
  %v331 = vsel %vm329, %v330, %v326
  %vm332 = vcmp.ge.s32.totalorder %v331, 4
  %v333 = vsel %vm332, %v319, 0.0
  %vm334 = vcmp.ge.s32.totalorder %v331, 2
  %336 = vrot.lane.b32.xlu0 %v319, 126
  %v337 = vpop.permute.xlu0 %336
  %v339 = vsel %vm334, %v337, 0.0
  %341 = vrot.lane.b32.xlu0 %v17, 120
  %v342 = vpop.permute.xlu0 %341
  %vm343 = vcmask 64512
  %v344 = vsel %vm343, %v342, 0
  %346 = vmatprep.subr.mxu0 0.0
  %347 = vmatpush1.msra.mxu0 %v339
  %348 = vmatprep.subr.mxu0 0.0
  %349 = vmatpush1.msra.mxu0 0.0
  %350 = vmatprep.subr.mxu0 0.0
  %351 = vmatpush1.msra.mxu0 0.0
  %352 = vmatprep.subr.mxu0 0.0
  %353 = vmatpush1.msra.mxu0 0.0
  %354 = vmatprep.subr.mxu0 0.0
  %355 = vmatpush1.msra.mxu0 0.0
  %356 = vmatprep.subr.mxu0 0.0
  %357 = vmatpush1.msra.mxu0 0.0
  %358 = vmatprep.subr.mxu0 0.0
  %359 = vmatpush1.msra.mxu0 0.0
  %360 = vmatprep.subr.mxu0 0.0
  %361 = vmatpush1.msra.mxu0 0.0
  %362 = vmatprep.subr.mxu0 0.0
  %363 = vmatpush1.msra.mxu0 0.0
  %364 = vmatprep.subr.mxu0 0.0
  %365 = vmatpush1.msra.mxu0 0.0
  %366 = vmatprep.subr.mxu0 0.0
  %367 = vmatpush1.msra.mxu0 0.0
  %368 = vmatprep.subr.mxu0 0.0
  %369 = vmatpush1.msra.mxu0 0.0
  %370 = vmatprep.subr.mxu0 0.0
  %371 = vmatpush1.msra.mxu0 0.0
  %372 = vmatprep.subr.mxu0 0.0
  %373 = vmatpush1.msra.mxu0 0.0
  %374 = vmatprep.subr.mxu0 0.0
  %375 = vmatpush1.msra.mxu0 0.0
  %376 = vmatprep.subr.mxu0 0.0
  %377 = vmatpush1.msra.mxu0 0.0
  %378 = vmatprep.subr.mxu0 0.0
  %379 = vmatpush1.msra.mxu0 0.0
  %380 = vmatprep.subr.mxu0 0.0
  %381 = vmatpush1.msra.mxu0 0.0
  %382 = vmatprep.subr.mxu0 0.0
  %383 = vmatpush1.msra.mxu0 0.0
  %384 = vmatprep.subr.mxu0 0.0
  %385 = vmatpush1.msra.mxu0 0.0
  %386 = vmatprep.subr.mxu0 0.0
  %387 = vmatpush1.msra.mxu0 0.0
  %388 = vmatprep.subr.mxu0 0.0
  %389 = vmatpush1.msra.mxu0 0.0
  %390 = vmatprep.subr.mxu0 0.0
  %391 = vmatpush1.msra.mxu0 0.0
  %392 = vmatprep.subr.mxu0 0.0
  %393 = vmatpush1.msra.mxu0 0.0
  %394 = vmatprep.subr.mxu0 0.0
  %395 = vmatpush1.msra.mxu0 0.0
  %396 = vmatprep.subr.mxu0 0.0
  %397 = vmatpush1.msra.mxu0 0.0
  %398 = vmatprep.subr.mxu0 0.0
  %399 = vmatpush1.msra.mxu0 0.0
  %400 = vmatprep.subr.mxu0 0.0
  %401 = vmatpush1.msra.mxu0 0.0
  %402 = vmatprep.subr.mxu0 0.0
  %403 = vmatpush1.msra.mxu0 0.0
  %404 = vmatprep.subr.mxu0 0.0
  %405 = vmatpush1.msra.mxu0 0.0
  %406 = vmatprep.subr.mxu0 0.0
  %407 = vmatpush1.msra.mxu0 0.0
  %408 = vmatprep.subr.mxu0 0.0
  %409 = vmatpush1.msra.mxu0 0.0
  %410 = vmatprep.mubr.f32.mxu0 0.0
  %411 = vmatmul.mubr.f32.gmra.mrb[0].mxu0 %v344
  %v412 = vpop.f32.mrb[0].mxu0
  %v413 = vadd.f32 0.0, %v412
  %v414 = vpop.f32.mrb[0].mxu0
  %415 = vdwg.mxu0
  %v416 = vsel %vm343, %v17, 0
  %418 = vmatprep.subr.mxu0 0.0
  %419 = vmatpush1.msra.mxu0 %v333
  %420 = vmatprep.subr.mxu0 0.0
  %421 = vmatpush1.msra.mxu0 0.0
  %422 = vmatprep.subr.mxu0 0.0
  %423 = vmatpush1.msra.mxu0 0.0
  %424 = vmatprep.subr.mxu0 0.0
  %425 = vmatpush1.msra.mxu0 0.0
  %426 = vmatprep.subr.mxu0 0.0
  %427 = vmatpush1.msra.mxu0 0.0
  %428 = vmatprep.subr.mxu0 0.0
  %429 = vmatpush1.msra.mxu0 0.0
  %430 = vmatprep.subr.mxu0 0.0
  %431 = vmatpush1.msra.mxu0 0.0
  %432 = vmatprep.subr.mxu0 0.0
  %433 = vmatpush1.msra.mxu0 0.0
  %434 = vmatprep.subr.mxu0 0.0
  %435 = vmatpush1.msra.mxu0 0.0
  %436 = vmatprep.subr.mxu0 0.0
  %437 = vmatpush1.msra.mxu0 0.0
  %438 = vmatprep.subr.mxu0 0.0
  %439 = vmatpush1.msra.mxu0 0.0
  %440 = vmatprep.subr.mxu0 0.0
  %441 = vmatpush1.msra.mxu0 0.0
  %442 = vmatprep.subr.mxu0 0.0
  %443 = vmatpush1.msra.mxu0 0.0
  %444 = vmatprep.subr.mxu0 0.0
  %445 = vmatpush1.msra.mxu0 0.0
  %446 = vmatprep.subr.mxu0 0.0
  %447 = vmatpush1.msra.mxu0 0.0
  %448 = vmatprep.subr.mxu0 0.0
  %449 = vmatpush1.msra.mxu0 0.0
  %450 = vmatprep.subr.mxu0 0.0
  %451 = vmatpush1.msra.mxu0 0.0
  %452 = vmatprep.subr.mxu0 0.0
  %453 = vmatpush1.msra.mxu0 0.0
  %454 = vmatprep.subr.mxu0 0.0
  %455 = vmatpush1.msra.mxu0 0.0
  %456 = vmatprep.subr.mxu0 0.0
  %457 = vmatpush1.msra.mxu0 0.0
  %458 = vmatprep.subr.mxu0 0.0
  %459 = vmatpush1.msra.mxu0 0.0
  %460 = vmatprep.subr.mxu0 0.0
  %461 = vmatpush1.msra.mxu0 0.0
  %462 = vmatprep.subr.mxu0 0.0
  %463 = vmatpush1.msra.mxu0 0.0
  %464 = vmatprep.subr.mxu0 0.0
  %465 = vmatpush1.msra.mxu0 0.0
  %466 = vmatprep.subr.mxu0 0.0
  %467 = vmatpush1.msra.mxu0 0.0
  %468 = vmatprep.subr.mxu0 0.0
  %469 = vmatpush1.msra.mxu0 0.0
  %470 = vmatprep.subr.mxu0 0.0
  %471 = vmatpush1.msra.mxu0 0.0
  %472 = vmatprep.subr.mxu0 0.0
  %473 = vmatpush1.msra.mxu0 0.0
  %474 = vmatprep.subr.mxu0 0.0
  %475 = vmatpush1.msra.mxu0 0.0
  %476 = vmatprep.subr.mxu0 0.0
  %477 = vmatpush1.msra.mxu0 0.0
  %478 = vmatprep.subr.mxu0 0.0
  %479 = vmatpush1.msra.mxu0 0.0
  %480 = vmatprep.subr.mxu0 0.0
  %481 = vmatpush1.msra.mxu0 0.0
  %482 = vmatprep.mubr.f32.mxu0 0.0
  %483 = vmatmul.mubr.f32.gmra.mrb[0].mxu0 %v416
  %v484 = vpop.f32.mrb[0].mxu0
  %v485 = vadd.f32 %v413, %v484
  %v486 = vpop.f32.mrb[0].mxu0
  %487 = vdwg.mxu0
  %488 = vrot.lane.b32.xlu0 %v17, 112
  %v489 = vpop.permute.xlu0 %488
  %490 = vrot.lane.b32.xlu0 %v319, 124
  %v491 = vpop.permute.xlu0 %490
  %v493 = vsel %vm343, %v489, 0
  %495 = vmatprep.subr.mxu0 0.0
  %496 = vmatpush1.msra.mxu0 %v491
  %497 = vmatprep.subr.mxu0 0.0
  %498 = vmatpush1.msra.mxu0 0.0
  %499 = vmatprep.subr.mxu0 0.0
  %500 = vmatpush1.msra.mxu0 0.0
  %501 = vmatprep.subr.mxu0 0.0
  %502 = vmatpush1.msra.mxu0 0.0
  %503 = vmatprep.subr.mxu0 0.0
  %504 = vmatpush1.msra.mxu0 0.0
  %505 = vmatprep.subr.mxu0 0.0
  %506 = vmatpush1.msra.mxu0 0.0
  %507 = vmatprep.subr.mxu0 0.0
  %508 = vmatpush1.msra.mxu0 0.0
  %509 = vmatprep.subr.mxu0 0.0
  %510 = vmatpush1.msra.mxu0 0.0
  %511 = vmatprep.subr.mxu0 0.0
  %512 = vmatpush1.msra.mxu0 0.0
  %513 = vmatprep.subr.mxu0 0.0
  %514 = vmatpush1.msra.mxu0 0.0
  %515 = vmatprep.subr.mxu0 0.0
  %516 = vmatpush1.msra.mxu0 0.0
  %517 = vmatprep.subr.mxu0 0.0
  %518 = vmatpush1.msra.mxu0 0.0
  %519 = vmatprep.subr.mxu0 0.0
  %520 = vmatpush1.msra.mxu0 0.0
  %521 = vmatprep.subr.mxu0 0.0
  %522 = vmatpush1.msra.mxu0 0.0
  %523 = vmatprep.subr.mxu0 0.0
  %524 = vmatpush1.msra.mxu0 0.0
  %525 = vmatprep.subr.mxu0 0.0
  %526 = vmatpush1.msra.mxu0 0.0
  %527 = vmatprep.subr.mxu0 0.0
  %528 = vmatpush1.msra.mxu0 0.0
  %529 = vmatprep.subr.mxu0 0.0
  %530 = vmatpush1.msra.mxu0 0.0
  %531 = vmatprep.subr.mxu0 0.0
  %532 = vmatpush1.msra.mxu0 0.0
  %533 = vmatprep.subr.mxu0 0.0
  %534 = vmatpush1.msra.mxu0 0.0
  %535 = vmatprep.subr.mxu0 0.0
  %536 = vmatpush1.msra.mxu0 0.0
  %537 = vmatprep.subr.mxu0 0.0
  %538 = vmatpush1.msra.mxu0 0.0
  %539 = vmatprep.subr.mxu0 0.0
  %540 = vmatpush1.msra.mxu0 0.0
  %541 = vmatprep.subr.mxu0 0.0
  %542 = vmatpush1.msra.mxu0 0.0
  %543 = vmatprep.subr.mxu0 0.0
  %544 = vmatpush1.msra.mxu0 0.0
  %545 = vmatprep.subr.mxu0 0.0
  %546 = vmatpush1.msra.mxu0 0.0
  %547 = vmatprep.subr.mxu0 0.0
  %548 = vmatpush1.msra.mxu0 0.0
  %549 = vmatprep.subr.mxu0 0.0
  %550 = vmatpush1.msra.mxu0 0.0
  %551 = vmatprep.subr.mxu0 0.0
  %552 = vmatpush1.msra.mxu0 0.0
  %553 = vmatprep.subr.mxu0 0.0
  %554 = vmatpush1.msra.mxu0 0.0
  %555 = vmatprep.subr.mxu0 0.0
  %556 = vmatpush1.msra.mxu0 0.0
  %557 = vmatprep.subr.mxu0 0.0
  %558 = vmatpush1.msra.mxu0 0.0
  %559 = vmatprep.mubr.f32.mxu0 0.0
  %560 = vmatmul.mubr.f32.gmra.mrb[0].mxu0 %v493
  %v561 = vpop.f32.mrb[0].mxu0
  %v562 = vadd.f32 0.0, %v561
  %v563 = vpop.f32.mrb[0].mxu0
  %564 = vdwg.mxu0
  %v565 = vadd.f32 %v485, %v562
  %566 = vset.pattern.permute.xlu0 24
  %567 = vperm.xlu0 %566, %v17
  %v568 = vpop.permute.xlu0 %567
  %v570 = vadd.f32 %v565, %v568
  %v571 = vmax.f32 %v570, 0.0
  %573 = vrot.lane.b32.xlu0 %v318, 124
  %v574 = vpop.permute.xlu0 %573
  %v576 = vadd.f32 %v571, %v574
  %v577 = vmax.f32 %v576, 0.0
  %v578 = vlaneseq
  %v579 = vshrl.u32 %v578, 7
  %v580 = vadd.s32 %v579, 8
  %v581 = vadd.s32 %v579, 16
  %v582 = vadd.s32 %v579, 24
  %vm583 = vcmp.eq.s32.totalorder %v579, %v19
  %vm584 = vcmp.eq.s32.totalorder %v580, %v19
  %vm585 = vcmp.eq.s32.totalorder %v581, %v19
  %vm586 = vcmp.eq.s32.totalorder %v582, %v19
  %v587 = vsel %vm583, 1, 0
  %v588 = vsel %vm584, 1, 0
  %v589 = vsel %vm585, 1, 0
  %v590 = vsel %vm586, 1, 0
  %v591 = vcvt.s32.f32 %v587
  %v592 = vcvt.s32.f32 %v588
  %v593 = vcvt.s32.f32 %v589
  %v594 = vcvt.s32.f32 %v590
  %vm595 = vcmask 261120
  %v597 = vsel %vm595, %v577, 0
  %599 = vmatprep.subr.mxu0 0.0
  %600 = vmatpush1.msra.mxu0 %v591
  %601 = vmatprep.subr.mxu0 0.0
  %602 = vmatpush1.msra.mxu0 %v592
  %603 = vmatprep.subr.mxu0 0.0
  %604 = vmatpush1.msra.mxu0 %v593
  %605 = vmatprep.subr.mxu0 0.0
  %606 = vmatpush1.msra.mxu0 %v594
  %607 = vmatprep.subr.mxu0 0.0
  %608 = vmatpush1.msra.mxu0 0.0
  %609 = vmatprep.subr.mxu0 0.0
  %610 = vmatpush1.msra.mxu0 0.0
  %611 = vmatprep.subr.mxu0 0.0
  %612 = vmatpush1.msra.mxu0 0.0
  %613 = vmatprep.subr.mxu0 0.0
  %614 = vmatpush1.msra.mxu0 0.0
  %615 = vmatprep.subr.mxu0 0.0
  %616 = vmatpush1.msra.mxu0 0.0
  %617 = vmatprep.subr.mxu0 0.0
  %618 = vmatpush1.msra.mxu0 0.0
  %619 = vmatprep.subr.mxu0 0.0
  %620 = vmatpush1.msra.mxu0 0.0
  %621 = vmatprep.subr.mxu0 0.0
  %622 = vmatpush1.msra.mxu0 0.0
  %623 = vmatprep.subr.mxu0 0.0
  %624 = vmatpush1.msra.mxu0 0.0
  %625 = vmatprep.subr.mxu0 0.0
  %626 = vmatpush1.msra.mxu0 0.0
  %627 = vmatprep.subr.mxu0 0.0
  %628 = vmatpush1.msra.mxu0 0.0
  %629 = vmatprep.subr.mxu0 0.0
  %630 = vmatpush1.msra.mxu0 0.0
  %631 = vmatprep.subr.mxu0 0.0
  %632 = vmatpush1.msra.mxu0 0.0
  %633 = vmatprep.subr.mxu0 0.0
  %634 = vmatpush1.msra.mxu0 0.0
  %635 = vmatprep.subr.mxu0 0.0
  %636 = vmatpush1.msra.mxu0 0.0
  %637 = vmatprep.subr.mxu0 0.0
  %638 = vmatpush1.msra.mxu0 0.0
  %639 = vmatprep.subr.mxu0 0.0
  %640 = vmatpush1.msra.mxu0 0.0
  %641 = vmatprep.subr.mxu0 0.0
  %642 = vmatpush1.msra.mxu0 0.0
  %643 = vmatprep.subr.mxu0 0.0
  %644 = vmatpush1.msra.mxu0 0.0
  %645 = vmatprep.subr.mxu0 0.0
  %646 = vmatpush1.msra.mxu0 0.0
  %647 = vmatprep.subr.mxu0 0.0
  %648 = vmatpush1.msra.mxu0 0.0
  %649 = vmatprep.subr.mxu0 0.0
  %650 = vmatpush1.msra.mxu0 0.0
  %651 = vmatprep.subr.mxu0 0.0
  %652 = vmatpush1.msra.mxu0 0.0
  %653 = vmatprep.subr.mxu0 0.0
  %654 = vmatpush1.msra.mxu0 0.0
  %655 = vmatprep.subr.mxu0 0.0
  %656 = vmatpush1.msra.mxu0 0.0
  %657 = vmatprep.subr.mxu0 0.0
  %658 = vmatpush1.msra.mxu0 0.0
  %659 = vmatprep.subr.mxu0 0.0
  %660 = vmatpush1.msra.mxu0 0.0
  %661 = vmatprep.subr.mxu0 0.0
  %662 = vmatpush1.msra.mxu0 0.0
  %663 = vmatprep.mubr.f32.mxu0 0.0
  %664 = vmatmul.mubr.f32.gmra.mrb[0].mxu0 %v597
  %v665 = vpop.f32.mrb[0].mxu0
  %v666 = vadd.f32 0.0, %v665
  %v667 = vpop.f32.mrb[0].mxu0
  %668 = vdwg.mxu0
  %669 = vst [vmem:[%s3] sm:$0xff] %v666
  // Predicated region
  $region14: #{temporal_block.1} parent=0 // pred_check
    _
  $region15: #{temporal_block.1} parent=0 // pred_check_branch
    %671 = sbr.rel (0) target = $region17
  $region16: #{temporal_block.1} parent=0 // pred_region
    _
  $region17: #{temporal_block.1} parent=0 // pred_fallthru
    _
  // Predicated region
  $region18: #{temporal_block.1} parent=0 // pred_check
    _
  $region19: #{temporal_block.1} parent=0 // pred_check_branch
    %673 = sbr.rel (0) target = $region21
  $region20: #{temporal_block.1} parent=0 // pred_region
    _
  $region21: #{temporal_block.1} parent=0 // pred_fallthru
    _

</llo_original>
